<compile_context>
chip_gen: v7x
topology: tpu7x:2x2x1
jax: 0.10.0
libtpu: 0.0.40
codegen_flags: <defaults>
</compile_context>

<pallas_src>
import jax
import jax.numpy as jnp
from jax import lax
from jax.experimental import pallas as pl
from jax.experimental.pallas import tpu as pltpu

EPS = 1e-5  # nn.LayerNorm default


def layernorm_kernel(x_ref, g_ref, b_ref, o_ref):
    # x_ref/o_ref: (b_blk, C, tile_t); g_ref/b_ref: (C, 1)
    x = x_ref[...].astype(jnp.float32)

    # Two-pass statistics over the channel (sublane) axis.
    mean = jnp.mean(x, axis=-2, keepdims=True)        # (b_blk, 1, tile_t)
    xc = x - mean
    var = jnp.mean(xc * xc, axis=-2, keepdims=True)   # (b_blk, 1, tile_t)
    inv = lax.rsqrt(var + EPS)                        # EUP, cheap

    gamma = g_ref[...].astype(jnp.float32)            # (C, 1) -> bcast over B,T
    beta = b_ref[...].astype(jnp.float32)
    o_ref[...] = (xc * inv * gamma + beta).astype(o_ref.dtype)


def _physical_vmem_bytes():
    try:
        return int(pltpu.get_tpu_info().vmem_capacity_bytes)
    except Exception:
        return 64 * 1024 * 1024  # conservative fallback (v7x per-TC VMEM)


def layer_norm_module(x, gamma, beta, *, tile_t=None, b_blk=None):
    """Equivalent of the PyTorch LayerNorm module forward.

    x: (B, C, T) -> (B, C, T); gamma, beta: (C,)
    """
    B, C, T = x.shape
    itemsize = jnp.dtype(x.dtype).itemsize
    phys_vmem = _physical_vmem_bytes()

    # Tile budget in f32 elements (intermediates are f32 regardless of the I/O
    # dtype): ~4 MiB on 64-MiB-VMEM chips (v7x), ~8 MiB on 128-MiB chips.
    target_f32_bytes = (4 << 20) if phys_vmem < (100 << 20) else (8 << 20)
    target_elems = target_f32_bytes // 4

    # --- T tiling ------------------------------------------------------------
    if tile_t is None:
        max_tile_t = max(128, (target_elems // max(1, C)) // 128 * 128)
        tile_t = T if T <= max_tile_t else max_tile_t
    else:
        tile_t = min(int(tile_t), T)
        if tile_t < T:
            tile_t = max(128, (tile_t // 128) * 128)   # lane dim multiple of 128

    # --- batch folding (for small C / short T) --------------------------------
    if b_blk is None:
        if tile_t >= T:
            b_blk = int(min(B, max(1, target_elems // max(1, C * T))))
            if b_blk >= B and B > 1:
                # Keep >= 2 parallel grid steps so both v7x TensorCores get work.
                b_blk = pl.cdiv(B, 2)
        else:
            b_blk = 1
    b_blk = int(min(max(1, int(b_blk)), B))

    grid = (pl.cdiv(B, b_blk), pl.cdiv(T, tile_t))

    # Scoped-VMEM request: double-buffered in + out, f32 intermediates, slack;
    # capped at 3/4 of physical VMEM to leave compiler headroom (esp. on v7x).
    tile_elems = b_blk * C * tile_t
    footprint = 4 * tile_elems * itemsize + 4 * tile_elems * 4 + (2 << 20)
    vmem_limit = int(min(max(footprint, 16 << 20), phys_vmem * 3 // 4))

    g2 = gamma.reshape(C, 1)
    b2 = beta.reshape(C, 1)

    return pl.pallas_call(
        layernorm_kernel,
        out_shape=jax.ShapeDtypeStruct((B, C, T), x.dtype),
        grid_spec=pltpu.PrefetchScalarGridSpec(
            num_scalar_prefetch=0,
            grid=grid,
            in_specs=[
                pl.BlockSpec((b_blk, C, tile_t), lambda b, t: (b, 0, t)),
                pl.BlockSpec((C, 1), lambda b, t: (0, 0)),
                pl.BlockSpec((C, 1), lambda b, t: (0, 0)),
            ],
            out_specs=pl.BlockSpec((b_blk, C, tile_t), lambda b, t: (b, 0, t)),
        ),
        compiler_params=pltpu.CompilerParams(
            dimension_semantics=("parallel", "parallel"),
            vmem_limit_bytes=vmem_limit,
        ),
    )(x, g2, b2)


def _reference(x, gamma, beta):
    # Plain-JAX reference: permute -> layernorm over C -> permute back.
    x_btc = jnp.transpose(x, (0, 2, 1)).astype(jnp.float32)
    mean = jnp.mean(x_btc, axis=-1, keepdims=True)
    var = jnp.mean((x_btc - mean) ** 2, axis=-1, keepdims=True)
    ref = (x_btc - mean) / jnp.sqrt(var + EPS) * gamma + beta
    return jnp.transpose(ref, (0, 2, 1)).astype(x.dtype)


if __name__ == "__main__":
    key = jax.random.PRNGKey(0)
    kx, kg, kb, kx2, kx3 = jax.random.split(key, 5)

    # Case 1: small shape (B=2, C=32, T=16); single full-T block, auto tiling.
    B, C, T = 2, 32, 16
    x = jax.random.normal(kx, (B, C, T), dtype=jnp.float32)
    gamma = 1.0 + 0.1 * jax.random.normal(kg, (C,), dtype=jnp.float32)
    beta = 0.1 * jax.random.normal(kb, (C,), dtype=jnp.float32)

    out = jax.block_until_ready(layer_norm_module(x, gamma, beta))
    ref = _reference(x, gamma, beta)
    assert out.shape == (B, C, T)
    assert jnp.allclose(out, ref, atol=1e-4, rtol=1e-4), "mismatch (case 1)"

    # Case 2: exercise partial last blocks on BOTH axes (no HBM pad/slice):
    # B=3 with b_blk=2, T=200 with tile_t=128 -> grid (2, 2), two tails.
    B2, T2 = 3, 200
    x2 = jax.random.normal(kx2, (B2, C, T2), dtype=jnp.float32)
    out2 = jax.block_until_ready(
        layer_norm_module(x2, gamma, beta, tile_t=128, b_blk=2))
    ref2 = _reference(x2, gamma, beta)
    assert out2.shape == (B2, C, T2)
    assert jnp.allclose(out2, ref2, atol=1e-4, rtol=1e-4), "mismatch (case 2)"

    # Case 3: auto path with batch folding (B=4, C=64, T=256).
    B3, C3, T3 = 4, 64, 256
    x3 = jax.random.normal(kx3, (B3, C3, T3), dtype=jnp.float32)
    g3 = jnp.linspace(0.5, 1.5, C3, dtype=jnp.float32)
    b3 = jnp.linspace(-0.2, 0.2, C3, dtype=jnp.float32)
    out3 = jax.block_until_ready(layer_norm_module(x3, g3, b3))
    ref3 = _reference(x3, g3, b3)
    assert out3.shape == (B3, C3, T3)
    assert jnp.allclose(out3, ref3, atol=1e-4, rtol=1e-4), "mismatch (case 3)"

    print("KERNEL_OK")
</pallas_src>

<mosaic_0001>
module attributes {stable_mosaic.version = 11 : i64} {
  func.func @layernorm_kernel(%arg0: i32, %arg1: i32, %arg2: memref<1x32x16xf32, #tpu.memory_space<vmem>>, %arg3: memref<32x1xf32, #tpu.memory_space<vmem>>, %arg4: memref<32x1xf32, #tpu.memory_space<vmem>>, %arg5: memref<1x32x16xf32, #tpu.memory_space<vmem>>) attributes {dimension_semantics = [#tpu.dimension_semantics<parallel>, #tpu.dimension_semantics<parallel>], iteration_bounds = array<i64: 2, 1>, scalar_prefetch = 0 : i64, scratch_operands = 0 : i64, tpu.core_type = #tpu.core_type<tc>, window_params = [{transform_indices = @transform_0, window_bounds = array<i64: 1, 32, 16>}, {pipeline_mode = #tpu.pipeline_mode<synchronous>, transform_indices = @transform_1, window_bounds = array<i64: 32, 1>}, {pipeline_mode = #tpu.pipeline_mode<synchronous>, transform_indices = @transform_2, window_bounds = array<i64: 32, 1>}, {transform_indices = @transform_3, window_bounds = array<i64: 1, 32, 16>}]} {
    %c0 = arith.constant 0 : index
    %c0_0 = arith.constant 0 : index
    %c0_1 = arith.constant 0 : index
    %0 = vector.load %arg2[%c0, %c0_0, %c0_1] : memref<1x32x16xf32, #tpu.memory_space<vmem>>, vector<1x32x16xf32>
    %cst = arith.constant dense<0.000000e+00> : vector<1x16xf32>
    %1 = vector.multi_reduction <add>, %0, %cst [1] : vector<1x32x16xf32> to vector<1x16xf32>
    %2 = vector.shape_cast %1 : vector<1x16xf32> to vector<1x1x16xf32>
    %cst_2 = arith.constant 3.200000e+01 : f32
    %3 = vector.broadcast %cst_2 : f32 to vector<1x1x16xf32>
    %4 = arith.divf %2, %3 : vector<1x1x16xf32>
    %5 = vector.broadcast %4 : vector<1x1x16xf32> to vector<1x32x16xf32>
    %6 = arith.subf %0, %5 : vector<1x32x16xf32>
    %7 = arith.mulf %6, %6 : vector<1x32x16xf32>
    %cst_3 = arith.constant dense<0.000000e+00> : vector<1x16xf32>
    %8 = vector.multi_reduction <add>, %7, %cst_3 [1] : vector<1x32x16xf32> to vector<1x16xf32>
    %9 = vector.shape_cast %8 : vector<1x16xf32> to vector<1x1x16xf32>
    %cst_4 = arith.constant 3.200000e+01 : f32
    %10 = vector.broadcast %cst_4 : f32 to vector<1x1x16xf32>
    %11 = arith.divf %9, %10 : vector<1x1x16xf32>
    %cst_5 = arith.constant 9.99999974E-6 : f32
    %12 = vector.broadcast %cst_5 : f32 to vector<1x1x16xf32>
    %13 = arith.addf %11, %12 : vector<1x1x16xf32>
    %14 = math.rsqrt %13 : vector<1x1x16xf32>
    %c0_6 = arith.constant 0 : index
    %c0_7 = arith.constant 0 : index
    %15 = vector.load %arg3[%c0_6, %c0_7] : memref<32x1xf32, #tpu.memory_space<vmem>>, vector<32x1xf32>
    %c0_8 = arith.constant 0 : index
    %c0_9 = arith.constant 0 : index
    %16 = vector.load %arg4[%c0_8, %c0_9] : memref<32x1xf32, #tpu.memory_space<vmem>>, vector<32x1xf32>
    %17 = vector.broadcast %14 : vector<1x1x16xf32> to vector<1x32x16xf32>
    %18 = arith.mulf %6, %17 : vector<1x32x16xf32>
    %19 = vector.shape_cast %15 : vector<32x1xf32> to vector<1x32x1xf32>
    %20 = vector.broadcast %19 : vector<1x32x1xf32> to vector<1x32x16xf32>
    %21 = arith.mulf %18, %20 : vector<1x32x16xf32>
    %22 = vector.shape_cast %16 : vector<32x1xf32> to vector<1x32x1xf32>
    %23 = vector.broadcast %22 : vector<1x32x1xf32> to vector<1x32x16xf32>
    %24 = arith.addf %21, %23 : vector<1x32x16xf32>
    %c0_10 = arith.constant 0 : index
    %c0_11 = arith.constant 0 : index
    %c0_12 = arith.constant 0 : index
    %25 = vector.load %arg5[%c0_10, %c0_11, %c0_12] : memref<1x32x16xf32, #tpu.memory_space<vmem>>, vector<1x32x16xf32>
    tpu.vector_store %arg5[%c0_10, %c0_11, %c0_12], %24 {strides = array<i32>} : memref<1x32x16xf32, #tpu.memory_space<vmem>>, vector<1x32x16xf32>,
    return
  }
  func.func @transform_0(%arg0: i32, %arg1: i32) -> (i32, i32, i32) {
    %c0_i32 = arith.constant 0 : i32
    %c0_i32_0 = arith.constant 0 : i32
    return %arg0, %c0_i32, %arg1 : i32, i32, i32
  }
  func.func @transform_1(%arg0: i32, %arg1: i32) -> (i32, i32) {
    %c0_i32 = arith.constant 0 : i32
    %c0_i32_0 = arith.constant 0 : i32
    %c0_i32_1 = arith.constant 0 : i32
    return %c0_i32, %c0_i32_0 : i32, i32
  }
  func.func @transform_2(%arg0: i32, %arg1: i32) -> (i32, i32) {
    %c0_i32 = arith.constant 0 : i32
    %c0_i32_0 = arith.constant 0 : i32
    %c0_i32_1 = arith.constant 0 : i32
    return %c0_i32, %c0_i32_0 : i32, i32
  }
  func.func @transform_3(%arg0: i32, %arg1: i32) -> (i32, i32, i32) {
    %c0_i32 = arith.constant 0 : i32
    %c0_i32_0 = arith.constant 0 : i32
    return %arg0, %c0_i32, %arg1 : i32, i32, i32
  }
}

</mosaic_0001>

<llo_original>
// kernel: tpu_custom_call.1
$region0: #{tpu_custom_call.1}
  #allocation0 [shape = 'u32[]', space=smem, size = 0x4, offset = 0x4, fixed_abs, tag = 'smem constant byte address 0x4 - core index']
  #allocation1 [shape = 'u32[144,128]{1,0:T(1,128)}', space=vmem, size = 0x12000, scoped, tag = 'internal scratch']
  %s0 = inlined_call_operand.vmem [shape: f32[2,32,16], index: 0, kind: input, shape index: {}]
  %s1 = inlined_call_operand.vmem [shape: f32[32,1], index: 1, kind: input, shape index: {}]
  %s2 = inlined_call_operand.vmem [shape: f32[32,1], index: 2, kind: input, shape index: {}]
  %s3 = inlined_call_operand.vmem [shape: f32[2,32,16], index: 3, kind: output, shape index: {}]
  %s4 = sld [smem:[#allocation0]]
  $region45: #{tpu_custom_call.1} parent=0
    _
  %s6 = ssub.s32 1, %s4
  %s7 = scalar_select 0, %s6, %s4
  loop: start=0, step=1, limit=4
  $region2: #{tpu_custom_call.1} parent=0 // loop_pre_header
    _
  $region3: #{tpu_custom_call.1} parent=0 // loop_header
    %s9 = sphi 0, %s13
    %p10 = scmp.ge.s32.totalorder %s9, 4
    %s16 = sphi 0, %s28
    %s17 = sphi 0, %s24
    %s18 = sphi 0, %s16
    %s19 = sphi 0, %s17
    %s20 = sphi 0, %s18
    %s21 = sphi 0, %s19
    %s33 = sphi 0, %s35
    %s36 = sphi 0, %s33
    %s37 = sphi 0, %s36
    %s53 = sphi 0, %s37
    %s57 = sphi 0, %s57
    %s59 = sphi 0, %s57
    %s60 = sphi 0, %s59
    %s74 = sphi 0, %s60
    %s78 = sphi 0, %s78
    %s80 = sphi 0, %s78
    %s81 = sphi 0, %s80
    %s95 = sphi 0, %s81
    %s103 = sphi 0, %s105
    %s106 = sphi 0, %s103
    %s107 = sphi 0, %s106
    %s123 = sphi 0, %s107
  $region4: #{tpu_custom_call.1} parent=0 // loop_header_branch
    %12 = sbr.rel (%p10) target = $region8
  $region5: #{tpu_custom_call.1} parent=0 // loop_body
    %s14 = ssub.s32 %s9, 1
    %s15 = ssub.s32 %s9, 2
    %s22 = sadd.s32 1, %s17
    %p23 = scmp.ge.s32.totalorder %s22, 1
    %s24 = scalar_select %p23, 0, %s22
    %s25 = sadd.s32 1, %s16
    %s26 = scalar_select %p23, %s25, %s16
    %p27 = scmp.ge.s32.totalorder %s26, 2
    %s28 = scalar_select %p27, 0, %s26
    %s29 = ssub.s32 %s16, %s28
    %s30 = ssub.s32 %s17, %s24
    %s31 = sor.u32 %s29, %s30
    %p32 = scmp.eq.s32.totalorder %s31, 0
    %s34 = sadd.s32 %s33, 1
    %s35 = scalar_select %p32, %s33, %s34
    %p38 = pneg %p32
    %p39 = scmp.eq.s32.totalorder %s9, 1
    %p40 = por %p38, %p39
    %p41 = scmp.ne.s32.totalorder %s33, %s36
    %p42 = scmp.eq.s32.totalorder %s9, 0
    %p43 = por %p41, %p42
    %p44 = scmp.ne.s32.totalorder %s33, %s36
    %p45 = scmp.eq.s32.totalorder %s14, 1
    %p46 = por %p44, %p45
    %p47 = scmp.ne.s32.totalorder %s36, %s37
    %p48 = scmp.eq.s32.totalorder %s14, 0
    %p49 = por %p47, %p48
    %p50 = scmp.ne.s32.totalorder %s36, %s37
    %p51 = scmp.eq.s32.totalorder %s15, 1
    %p52 = por %p50, %p51
    %p54 = scmp.ne.s32.totalorder %s37, %s53
    %p55 = scmp.eq.s32.totalorder %s15, 0
    %p56 = por %p54, %p55
    %s58 = sadd.s32 %s57, 1
    %p61 = scmp.eq.s32.totalorder %s9, 1
    %p62 = scmp.ne.s32.totalorder %s57, %s59
    %p63 = scmp.eq.s32.totalorder %s9, 0
    %p64 = por %p62, %p63
    %p65 = scmp.ne.s32.totalorder %s57, %s59
    %p66 = scmp.eq.s32.totalorder %s14, 1
    %p67 = por %p65, %p66
    %p68 = scmp.ne.s32.totalorder %s59, %s60
    %p69 = scmp.eq.s32.totalorder %s14, 0
    %p70 = por %p68, %p69
    %p71 = scmp.ne.s32.totalorder %s59, %s60
    %p72 = scmp.eq.s32.totalorder %s15, 1
    %p73 = por %p71, %p72
    %p75 = scmp.ne.s32.totalorder %s60, %s74
    %p76 = scmp.eq.s32.totalorder %s15, 0
    %p77 = por %p75, %p76
    %s79 = sadd.s32 %s78, 1
    %p82 = scmp.eq.s32.totalorder %s9, 1
    %p83 = scmp.ne.s32.totalorder %s78, %s80
    %p84 = scmp.eq.s32.totalorder %s9, 0
    %p85 = por %p83, %p84
    %p86 = scmp.ne.s32.totalorder %s78, %s80
    %p87 = scmp.eq.s32.totalorder %s14, 1
    %p88 = por %p86, %p87
    %p89 = scmp.ne.s32.totalorder %s80, %s81
    %p90 = scmp.eq.s32.totalorder %s14, 0
    %p91 = por %p89, %p90
    %p92 = scmp.ne.s32.totalorder %s80, %s81
    %p93 = scmp.eq.s32.totalorder %s15, 1
    %p94 = por %p92, %p93
    %p96 = scmp.ne.s32.totalorder %s81, %s95
    %p97 = scmp.eq.s32.totalorder %s15, 0
    %p98 = por %p96, %p97
    %s99 = ssub.s32 %s16, %s28
    %s100 = ssub.s32 %s17, %s24
    %s101 = sor.u32 %s99, %s100
    %p102 = scmp.eq.s32.totalorder %s101, 0
    %s104 = sadd.s32 %s103, 1
    %s105 = scalar_select %p102, %s103, %s104
    %p108 = pneg %p102
    %p109 = scmp.eq.s32.totalorder %s9, 1
    %p110 = por %p108, %p109
    %p111 = scmp.ne.s32.totalorder %s103, %s106
    %p112 = scmp.eq.s32.totalorder %s9, 0
    %p113 = por %p111, %p112
    %p114 = scmp.ne.s32.totalorder %s103, %s106
    %p115 = scmp.eq.s32.totalorder %s14, 1
    %p116 = por %p114, %p115
    %p117 = scmp.ne.s32.totalorder %s106, %s107
    %p118 = scmp.eq.s32.totalorder %s14, 0
    %p119 = por %p117, %p118
    %p120 = scmp.ne.s32.totalorder %s106, %s107
    %p121 = scmp.eq.s32.totalorder %s15, 1
    %p122 = por %p120, %p121
    %p124 = scmp.ne.s32.totalorder %s107, %s123
    %p125 = scmp.eq.s32.totalorder %s15, 0
    %p126 = por %p124, %p125
    %p127 = scmp.le.s32.totalorder 1, %s9
    %p128 = scmp.lt.s32.totalorder %s9, 3
    %p129 = pnand %p127, %p128
    %p130 = pneg %p129
    // Predicated region
    $region9: #{tpu_custom_call.1} parent=5 // pred_check
      _
    $region10: #{tpu_custom_call.1} parent=5 // pred_check_branch
      %132 = sbr.rel (%p129) target = $region12
    $region11: #{tpu_custom_call.1} parent=5 // pred_region
      %s133 = ssub.s32 %s9, 1
      // Predicated region
      $region13: #{tpu_custom_call.1} parent=11 // pred_check
        %p134 = pneg %p70
      $region14: #{tpu_custom_call.1} parent=11 // pred_check_branch
        %136 = sbr.rel (%p134) target = $region16
      $region15: #{tpu_custom_call.1} parent=11 // pred_region
        _
      $region16: #{tpu_custom_call.1} parent=11 // pred_fallthru
        _
      // Predicated region
      $region17: #{tpu_custom_call.1} parent=11 // pred_check
        %p137 = pneg %p91
      $region18: #{tpu_custom_call.1} parent=11 // pred_check_branch
        %139 = sbr.rel (%p137) target = $region20
      $region19: #{tpu_custom_call.1} parent=11 // pred_region
        _
      $region20: #{tpu_custom_call.1} parent=11 // pred_fallthru
        _
    $region12: #{tpu_custom_call.1} parent=5 // pred_fallthru
      _
    %p140 = scmp.lt.s32.totalorder %s9, 2
    // Predicated region
    $region21: #{tpu_custom_call.1} parent=5 // pred_check
      %p141 = pneg %p140
    $region22: #{tpu_custom_call.1} parent=5 // pred_check_branch
      %143 = sbr.rel (%p141) target = $region24
    $region23: #{tpu_custom_call.1} parent=5 // pred_region
      // Predicated region
      $region25: #{tpu_custom_call.1} parent=23 // pred_check
        %p144 = pneg %p43
      $region26: #{tpu_custom_call.1} parent=23 // pred_check_branch
        %146 = sbr.rel (%p144) target = $region28
      $region27: #{tpu_custom_call.1} parent=23 // pred_region
        %p147 = scmp.lt.s32.totalorder %s16, 1
        %s148 = scalar_select %p147, %s16, 1
        %p149 = scmp.lt.s32.totalorder %s17, 0
        %s150 = scalar_select %p149, %s17, 0
        %s151 = smul.addr %s148, 4
        %s152 = sadd.s32 %s150, %s151
        %s153 = smul.addr %s152, 8
        %s154 = scalar_lea.vmem %s0, %s153
      $region28: #{tpu_custom_call.1} parent=23 // pred_fallthru
        _
    $region24: #{tpu_custom_call.1} parent=5 // pred_fallthru
      _
    %p155 = scmp.le.s32.totalorder 1, %s9
    %p156 = scmp.lt.s32.totalorder %s9, 3
    %p157 = pnand %p155, %p156
    %p158 = pneg %p157
    // Predicated region
    $region29: #{tpu_custom_call.1} parent=5 // pred_check
      _
    $region30: #{tpu_custom_call.1} parent=5 // pred_check_branch
      %160 = sbr.rel (%p157) target = $region32
    $region31: #{tpu_custom_call.1} parent=5 // pred_region
      %s161 = ssub.s32 %s9, 1
      %p162 = scmp.lt.s32.totalorder %s18, 1
      %s163 = scalar_select %p162, %s18, 1
      %p164 = scmp.lt.s32.totalorder %s19, 0
      %s165 = scalar_select %p164, %s19, 0
      %s166 = smul.addr %s163, 4
      %s167 = sadd.s32 %s165, %s166
      %s168 = smul.addr %s167, 8
      %s169 = scalar_lea.vmem %s0, %s168
      %p170 = pneg %p49
      %p171 = pneg %p46
      %p172 = pneg %p70
      %p173 = pneg %p67
      %p174 = pneg %p91
      %p175 = pneg %p88
      %p176 = pneg %p119
      %p177 = pneg %p116
      %p178 = scmp.lt.s32.totalorder %s18, 1
      %s179 = scalar_select %p178, %s18, 1
      %p180 = scmp.lt.s32.totalorder %s19, 0
      %s181 = scalar_select %p180, %s19, 0
      %s182 = smul.addr %s179, 4
      %s183 = sadd.s32 %s181, %s182
      %s184 = smul.addr %s183, 8
      %s185 = scalar_lea.vmem %s3, %s184
      %p186 = scmp.lt.s32.totalorder %s18, 1
      %s187 = scalar_select %p186, %s18, 1
      %p188 = scmp.lt.s32.totalorder %s19, 0
      %s189 = scalar_select %p188, %s19, 0
      %s190 = smul.addr %s187, 4
      %s191 = sadd.s32 %s189, %s190
      %s192 = smul.addr %s191, 8
      %s193 = scalar_lea.vmem %s0, %s192
      %p194 = scmp.lt.s32.totalorder %s18, 1
      %s195 = scalar_select %p194, %s18, 1
      %p196 = scmp.lt.s32.totalorder %s19, 0
      %s197 = scalar_select %p196, %s19, 0
      %s198 = smul.addr %s195, 4
      %s199 = sadd.s32 %s197, %s198
      %s200 = smul.addr %s199, 8
      %s201 = scalar_lea.vmem %s3, %s200
      %v202 = vld [vmem:[%s193] sm:$0xff]
      %v203 = vld [vmem:[%s193 + $0x8] sm:$0xff]
      %v204 = vld [vmem:[%s193 + $0x10] sm:$0xff]
      %v205 = vld [vmem:[%s193 + $0x18] sm:$0xff]
      %vm206 = vcmask 130048
      %v207 = vsel %vm206, %v202, 0.0
      %v208 = vsel %vm206, %v203, 0.0
      %v209 = vadd.f32 %v207, %v208
      %v210 = vsel %vm206, %v204, 0.0
      %v211 = vadd.f32 %v209, %v210
      %v212 = vsel %vm206, %v205, 0.0
      %v213 = vadd.f32 %v211, %v212
      %v214 = vrot.slane %v213, 4
      %v215 = vadd.f32 %v213, %v214
      %v216 = vrot.slane %v215, 2
      %v217 = vadd.f32 %v215, %v216
      %v218 = vrot.slane %v217, 1
      %v219 = vadd.f32 %v217, %v218
      %v220 = vrcp.pop 32.0
      %v221 = vmul.f32 %v219, %v220
      %v222 = vsub.f32 %v202, %v221
      %v223 = vsub.f32 %v203, %v221
      %v224 = vsub.f32 %v204, %v221
      %v225 = vsub.f32 %v205, %v221
      %v226 = vmul.f32 %v222, %v222
      %v227 = vmul.f32 %v223, %v223
      %v228 = vmul.f32 %v224, %v224
      %v229 = vmul.f32 %v225, %v225
      %v230 = vsel %vm206, %v226, 0.0
      %v231 = vsel %vm206, %v227, 0.0
      %v232 = vadd.f32 %v230, %v231
      %v233 = vsel %vm206, %v228, 0.0
      %v234 = vadd.f32 %v232, %v233
      %v235 = vsel %vm206, %v229, 0.0
      %v236 = vadd.f32 %v234, %v235
      %v237 = vrot.slane %v236, 4
      %v238 = vadd.f32 %v236, %v237
      %v239 = vrot.slane %v238, 2
      %v240 = vadd.f32 %v238, %v239
      %v241 = vrot.slane %v240, 1
      %v242 = vadd.f32 %v240, %v241
      %v243 = vmul.f32 %v242, %v220
      %v244 = vadd.f32 %v243, 1e-05
      %v245 = vrsqrt.pop %v244
      %v246 = vld [vmem:[%s1] sm:$0xff]
      %v247 = vld [vmem:[%s1 + $0x8] sm:$0xff]
      %v248 = vld [vmem:[%s1 + $0x10] sm:$0xff]
      %v249 = vld [vmem:[%s1 + $0x18] sm:$0xff]
      %v250 = vld [vmem:[%s2] sm:$0xff]
      %v251 = vld [vmem:[%s2 + $0x8] sm:$0xff]
      %v252 = vld [vmem:[%s2 + $0x10] sm:$0xff]
      %v253 = vld [vmem:[%s2 + $0x18] sm:$0xff]
      %v254 = vmul.f32 %v222, %v245
      %v255 = vmul.f32 %v223, %v245
      %v256 = vmul.f32 %v224, %v245
      %v257 = vmul.f32 %v225, %v245
      %259 = vset.pattern.permute.xlu0 0
      %260 = vperm.xlu0 %259, %v246
      %v261 = vpop.permute.xlu0 %260
      %264 = vset.pattern.permute.xlu0 0
      %265 = vperm.xlu0 %264, %v247
      %v266 = vpop.permute.xlu0 %265
      %269 = vset.pattern.permute.xlu0 0
      %270 = vperm.xlu0 %269, %v248
      %v271 = vpop.permute.xlu0 %270
      %274 = vset.pattern.permute.xlu0 0
      %275 = vperm.xlu0 %274, %v249
      %v276 = vpop.permute.xlu0 %275
      %v278 = vmul.f32 %v254, %v261
      %v279 = vmul.f32 %v255, %v266
      %v280 = vmul.f32 %v256, %v271
      %v281 = vmul.f32 %v257, %v276
      %283 = vset.pattern.permute.xlu0 0
      %284 = vperm.xlu0 %283, %v250
      %v285 = vpop.permute.xlu0 %284
      %288 = vset.pattern.permute.xlu0 0
      %289 = vperm.xlu0 %288, %v251
      %v290 = vpop.permute.xlu0 %289
      %293 = vset.pattern.permute.xlu0 0
      %294 = vperm.xlu0 %293, %v252
      %v295 = vpop.permute.xlu0 %294
      %298 = vset.pattern.permute.xlu0 0
      %299 = vperm.xlu0 %298, %v253
      %v300 = vpop.permute.xlu0 %299
      %v302 = vadd.f32 %v278, %v285
      %v303 = vadd.f32 %v279, %v290
      %v304 = vadd.f32 %v280, %v295
      %v305 = vadd.f32 %v281, %v300
      %306 = vst.msk [vmem:[%s201] sm:$0xff] %vm206, %v302
      %307 = vst.msk [vmem:[%s201 + $0x8] sm:$0xff] %vm206, %v303
      %308 = vst.msk [vmem:[%s201 + $0x10] sm:$0xff] %vm206, %v304
      %309 = vst.msk [vmem:[%s201 + $0x18] sm:$0xff] %vm206, %v305
      %p310 = scmp.lt.s32.totalorder %s18, 1
      %s311 = scalar_select %p310, %s18, 1
      %p312 = scmp.lt.s32.totalorder %s19, 0
      %s313 = scalar_select %p312, %s19, 0
      %s314 = smul.addr %s311, 4
      %s315 = sadd.s32 %s313, %s314
      %s316 = smul.addr %s315, 8
      %s317 = scalar_lea.vmem %s3, %s316
      // Predicated region
      $region33: #{tpu_custom_call.1} parent=31 // pred_check
        %p318 = pneg %p116
      $region34: #{tpu_custom_call.1} parent=31 // pred_check_branch
        %320 = sbr.rel (%p318) target = $region36
      $region35: #{tpu_custom_call.1} parent=31 // pred_region
        _
      $region36: #{tpu_custom_call.1} parent=31 // pred_fallthru
        _
    $region32: #{tpu_custom_call.1} parent=5 // pred_fallthru
      _
    %p321 = scmp.le.s32.totalorder 2, %s9
    // Predicated region
    $region37: #{tpu_custom_call.1} parent=5 // pred_check
      %p322 = pneg %p321
    $region38: #{tpu_custom_call.1} parent=5 // pred_check_branch
      %324 = sbr.rel (%p322) target = $region40
    $region39: #{tpu_custom_call.1} parent=5 // pred_region
      %s325 = ssub.s32 %s9, 2
      // Predicated region
      $region41: #{tpu_custom_call.1} parent=39 // pred_check
        %p326 = pneg %p122
      $region42: #{tpu_custom_call.1} parent=39 // pred_check_branch
        %328 = sbr.rel (%p326) target = $region44
      $region43: #{tpu_custom_call.1} parent=39 // pred_region
        %p329 = scmp.lt.s32.totalorder %s20, 1
        %s330 = scalar_select %p329, %s20, 1
        %p331 = scmp.lt.s32.totalorder %s21, 0
        %s332 = scalar_select %p331, %s21, 0
        %s333 = smul.addr %s330, 4
        %s334 = sadd.s32 %s332, %s333
        %s335 = smul.addr %s334, 8
        %s336 = scalar_lea.vmem %s3, %s335
      $region44: #{tpu_custom_call.1} parent=39 // pred_fallthru
        _
    $region40: #{tpu_custom_call.1} parent=5 // pred_fallthru
      _
  $region6: #{tpu_custom_call.1} parent=0 // loop_footer
    %s13 = sadd.s32 1, %s9
  $region7: #{tpu_custom_call.1} parent=0 // loop_footer_branch
    %8 = sbr.rel target = $region3
  $region8: #{tpu_custom_call.1} parent=0 // loop_exit
    _

</llo_original>
